<compile_context>
chip_gen: v6e
topology: v6e:2x2x1
jax: 0.10.0
libtpu: 0.0.40
codegen_flags: <defaults>
</compile_context>

<pallas_src>
import jax
import jax.numpy as jnp
from jax.experimental import pallas as pl
from jax.experimental.pallas import tpu as pltpu

IN_F, HID, OUT = 28 * 28, 200, 10        # logical (PyTorch) sizes
IN_P, HID_P, OUT_P = 896, 256, 128       # padded sizes (multiples of 128)


def _round_up(n: int, m: int) -> int:
    return ((n + m - 1) // m) * m


def _mlp_kernel(x_ref, w1_ref, b1_ref, w2_ref, b2_ref, w3_ref, b3_ref, out_ref):
    # bf16 operands feed the MXU with f32 accumulation; bias add + ReLU run on the
    # VPU in f32 (free filler under the MXU-bound regime).  Hidden activations are
    # recast to bf16 only to feed the next matmul.
    x = x_ref[...]
    h1 = jnp.dot(x, w1_ref[...], preferred_element_type=jnp.float32) + b1_ref[...]
    h1 = jnp.maximum(h1, 0.0).astype(w2_ref.dtype)
    h2 = jnp.dot(h1, w2_ref[...], preferred_element_type=jnp.float32) + b2_ref[...]
    h2 = jnp.maximum(h2, 0.0).astype(w3_ref.dtype)
    h3 = jnp.dot(h2, w3_ref[...], preferred_element_type=jnp.float32) + b3_ref[...]
    out_ref[...] = h3.astype(out_ref.dtype)


@jax.jit
def mlp_forward(x, params):
    """x: (B, 1, 28, 28) float32 (NCHW). Returns (logits (B, 10), score_diff scalar 0)."""
    w1, b1, w2, b2, w3, b3 = params
    b = x.shape[0]
    x2d = x.reshape(b, IN_F)  # same row-major flatten as torch .view(-1, 784)

    # Batch tiling: biggest tile <= 512 rows (multiple of 8 for sublane alignment).
    tile_b = min(512, _round_up(b, 8))
    b_pad = _round_up(b, tile_b)
    grid = (b_pad // tile_b,)

    # Zero-pad to MXU/lane-friendly shapes (numerically identical: padded rows/cols
    # of the weights and padded bias lanes are zero, and logits are sliced below).
    xp = jnp.pad(x2d, ((0, b_pad - b), (0, IN_P - IN_F))).astype(jnp.bfloat16)
    w1p = jnp.pad(w1, ((0, IN_P - IN_F), (0, HID_P - HID))).astype(jnp.bfloat16)
    w2p = jnp.pad(w2, ((0, HID_P - HID), (0, HID_P - HID))).astype(jnp.bfloat16)
    w3p = jnp.pad(w3, ((0, HID_P - HID), (0, OUT_P - OUT))).astype(jnp.bfloat16)
    b1p = jnp.pad(b1, ((0, 0), (0, HID_P - HID)))   # biases stay f32
    b2p = jnp.pad(b2, ((0, 0), (0, HID_P - HID)))
    b3p = jnp.pad(b3, ((0, 0), (0, OUT_P - OUT)))

    const = lambda shape: pl.BlockSpec(shape, lambda i: tuple(0 for _ in shape))
    logits_p = pl.pallas_call(
        _mlp_kernel,
        out_shape=jax.ShapeDtypeStruct((b_pad, OUT_P), jnp.float32),
        grid=grid,
        in_specs=[
            pl.BlockSpec((tile_b, IN_P), lambda i: (i, 0)),   # streamed / double-buffered
            const(w1p.shape), const(b1p.shape),               # VMEM-resident across steps
            const(w2p.shape), const(b2p.shape),
            const(w3p.shape), const(b3p.shape),
        ],
        out_specs=pl.BlockSpec((tile_b, OUT_P), lambda i: (i, 0)),  # lane-dense stores
        compiler_params=pltpu.CompilerParams(
            dimension_semantics=("parallel",),   # shard batch steps across TCs on v7x
        ),
    )(xp, w1p, b1p, w2p, b2p, w3p, b3p)

    logits = logits_p[:b, :OUT]
    # weight_merge=False branch of the torch module returns (x, torch.tensor(0))
    return logits, jnp.array(0, dtype=jnp.int32)


def init_params(key):
    """Deterministic init mimicking nn.Linear's default U(-1/sqrt(fan_in), +1/sqrt(fan_in)).

    Weights stored as (in_features, out_features); biases kept 2D (1, out).
    """
    dims = [(IN_F, HID), (HID, HID), (HID, OUT)]
    params = []
    for i, (fan_in, fan_out) in enumerate(dims):
        kw, kb = jax.random.split(jax.random.fold_in(key, i))
        bound = 1.0 / jnp.sqrt(jnp.float32(fan_in))
        w = jax.random.uniform(kw, (fan_in, fan_out), jnp.float32, -bound, bound)
        bias = jax.random.uniform(kb, (1, fan_out), jnp.float32, -bound, bound)
        params.extend([w, bias])
    return tuple(params)


def _reference_f32(x, params):
    w1, b1, w2, b2, w3, b3 = params
    h = x.reshape(x.shape[0], -1)
    h = jnp.maximum(h @ w1 + b1, 0.0)
    h = jnp.maximum(h @ w2 + b2, 0.0)
    return h @ w3 + b3


def _reference_bf16(x, params):
    w1, b1, w2, b2, w3, b3 = params
    cast = lambda a: a.astype(jnp.bfloat16)
    dot = lambda a, w: jnp.dot(cast(a), cast(w), preferred_element_type=jnp.float32)
    h = x.reshape(x.shape[0], -1)
    h = jnp.maximum(dot(h, w1) + b1, 0.0)
    h = jnp.maximum(dot(h, w2) + b2, 0.0)
    return dot(h, w3) + b3


if __name__ == "__main__":
    key = jax.random.PRNGKey(0)
    k_x, k_p = jax.random.split(key)
    batch = 2
    x = jax.random.normal(k_x, (batch, 1, 28, 28), jnp.float32)  # NCHW, like MNIST
    params = init_params(k_p)

    logits, score_diff = mlp_forward(x, params)
    logits = jax.block_until_ready(logits)

    assert logits.shape == (batch, OUT), logits.shape
    ref32 = _reference_f32(x, params)
    ref16 = _reference_bf16(x, params)
    assert jnp.allclose(logits, ref16, atol=1e-2, rtol=1e-2), "mismatch vs bf16 reference"
    assert jnp.allclose(logits, ref32, atol=5e-2, rtol=5e-2), "mismatch vs f32 reference"
    assert int(score_diff) == 0

    print("KERNEL_OK")
</pallas_src>

<mosaic_0001>
module attributes {stable_mosaic.version = 11 : i64} {
  func.func @_mlp_kernel(%arg0: i32, %arg1: memref<8x896xbf16, #tpu.memory_space<vmem>>, %arg2: memref<896x256xbf16, #tpu.memory_space<vmem>>, %arg3: memref<1x256xf32, #tpu.memory_space<vmem>>, %arg4: memref<256x256xbf16, #tpu.memory_space<vmem>>, %arg5: memref<1x256xf32, #tpu.memory_space<vmem>>, %arg6: memref<256x128xbf16, #tpu.memory_space<vmem>>, %arg7: memref<1x128xf32, #tpu.memory_space<vmem>>, %arg8: memref<8x128xf32, #tpu.memory_space<vmem>>) attributes {dimension_semantics = [#tpu.dimension_semantics<parallel>], iteration_bounds = array<i64: 1>, scalar_prefetch = 0 : i64, scratch_operands = 0 : i64, tpu.core_type = #tpu.core_type<tc>, window_params = [{transform_indices = @transform_0, window_bounds = array<i64: 8, 896>}, {pipeline_mode = #tpu.pipeline_mode<synchronous>, transform_indices = @transform_1, window_bounds = array<i64: 896, 256>}, {pipeline_mode = #tpu.pipeline_mode<synchronous>, transform_indices = @transform_2, window_bounds = array<i64: 1, 256>}, {pipeline_mode = #tpu.pipeline_mode<synchronous>, transform_indices = @transform_3, window_bounds = array<i64: 256, 256>}, {pipeline_mode = #tpu.pipeline_mode<synchronous>, transform_indices = @transform_4, window_bounds = array<i64: 1, 256>}, {pipeline_mode = #tpu.pipeline_mode<synchronous>, transform_indices = @transform_5, window_bounds = array<i64: 256, 128>}, {pipeline_mode = #tpu.pipeline_mode<synchronous>, transform_indices = @transform_6, window_bounds = array<i64: 1, 128>}, {transform_indices = @transform_7, window_bounds = array<i64: 8, 128>}]} {
    %c0 = arith.constant 0 : index
    %c0_0 = arith.constant 0 : index
    %0 = vector.load %arg1[%c0, %c0_0] : memref<8x896xbf16, #tpu.memory_space<vmem>>, vector<8x896xbf16>
    %c0_1 = arith.constant 0 : index
    %c0_2 = arith.constant 0 : index
    %1 = vector.load %arg2[%c0_1, %c0_2] : memref<896x256xbf16, #tpu.memory_space<vmem>>, vector<896x256xbf16>
    %cst = arith.constant dense<0.000000e+00> : vector<8x256xf32>
    %2 = tpu.matmul %0, %1, %cst {dimension_numbers = #tpu.dot_dimension_numbers<[1], [0], [0], [1], [0, 0, 1, 1], [], []>} : vector<8x896xbf16>, vector<896x256xbf16>, vector<8x256xf32> -> vector<8x256xf32>
    %c0_3 = arith.constant 0 : index
    %c0_4 = arith.constant 0 : index
    %3 = vector.load %arg3[%c0_3, %c0_4] : memref<1x256xf32, #tpu.memory_space<vmem>>, vector<1x256xf32>
    %4 = vector.broadcast %3 : vector<1x256xf32> to vector<8x256xf32>
    %5 = arith.addf %2, %4 : vector<8x256xf32>
    %cst_5 = arith.constant 0.000000e+00 : f32
    %6 = vector.broadcast %cst_5 : f32 to vector<8x256xf32>
    %7 = arith.maximumf %5, %6 : vector<8x256xf32>
    %8 = arith.truncf %7 : vector<8x256xf32> to vector<8x256xbf16>
    %c0_6 = arith.constant 0 : index
    %c0_7 = arith.constant 0 : index
    %9 = vector.load %arg4[%c0_6, %c0_7] : memref<256x256xbf16, #tpu.memory_space<vmem>>, vector<256x256xbf16>
    %cst_8 = arith.constant dense<0.000000e+00> : vector<8x256xf32>
    %10 = tpu.matmul %8, %9, %cst_8 {dimension_numbers = #tpu.dot_dimension_numbers<[1], [0], [0], [1], [0, 0, 1, 1], [], []>} : vector<8x256xbf16>, vector<256x256xbf16>, vector<8x256xf32> -> vector<8x256xf32>
    %c0_9 = arith.constant 0 : index
    %c0_10 = arith.constant 0 : index
    %11 = vector.load %arg5[%c0_9, %c0_10] : memref<1x256xf32, #tpu.memory_space<vmem>>, vector<1x256xf32>
    %12 = vector.broadcast %11 : vector<1x256xf32> to vector<8x256xf32>
    %13 = arith.addf %10, %12 : vector<8x256xf32>
    %cst_11 = arith.constant 0.000000e+00 : f32
    %14 = vector.broadcast %cst_11 : f32 to vector<8x256xf32>
    %15 = arith.maximumf %13, %14 : vector<8x256xf32>
    %16 = arith.truncf %15 : vector<8x256xf32> to vector<8x256xbf16>
    %c0_12 = arith.constant 0 : index
    %c0_13 = arith.constant 0 : index
    %17 = vector.load %arg6[%c0_12, %c0_13] : memref<256x128xbf16, #tpu.memory_space<vmem>>, vector<256x128xbf16>
    %cst_14 = arith.constant dense<0.000000e+00> : vector<8x128xf32>
    %18 = tpu.matmul %16, %17, %cst_14 {dimension_numbers = #tpu.dot_dimension_numbers<[1], [0], [0], [1], [0, 0, 1, 1], [], []>} : vector<8x256xbf16>, vector<256x128xbf16>, vector<8x128xf32> -> vector<8x128xf32>
    %c0_15 = arith.constant 0 : index
    %c0_16 = arith.constant 0 : index
    %19 = vector.load %arg7[%c0_15, %c0_16] : memref<1x128xf32, #tpu.memory_space<vmem>>, vector<1x128xf32>
    %20 = vector.broadcast %19 : vector<1x128xf32> to vector<8x128xf32>
    %21 = arith.addf %18, %20 : vector<8x128xf32>
    %c0_17 = arith.constant 0 : index
    %c0_18 = arith.constant 0 : index
    %22 = vector.load %arg8[%c0_17, %c0_18] : memref<8x128xf32, #tpu.memory_space<vmem>>, vector<8x128xf32>
    tpu.vector_store %arg8[%c0_17, %c0_18], %21 {strides = array<i32>} : memref<8x128xf32, #tpu.memory_space<vmem>>, vector<8x128xf32>,
    return
  }
  func.func @transform_0(%arg0: i32) -> (i32, i32) {
    %c0_i32 = arith.constant 0 : i32
    %c0_i32_0 = arith.constant 0 : i32
    return %arg0, %c0_i32 : i32, i32
  }
  func.func @transform_1(%arg0: i32) -> (i32, i32) {
    %c0_i32 = arith.constant 0 : i32
    %c0_i32_0 = arith.constant 0 : i32
    %c0_i32_1 = arith.constant 0 : i32
    return %c0_i32, %c0_i32_0 : i32, i32
  }
  func.func @transform_2(%arg0: i32) -> (i32, i32) {
    %c0_i32 = arith.constant 0 : i32
    %c0_i32_0 = arith.constant 0 : i32
    %c0_i32_1 = arith.constant 0 : i32
    return %c0_i32, %c0_i32_0 : i32, i32
  }
  func.func @transform_3(%arg0: i32) -> (i32, i32) {
    %c0_i32 = arith.constant 0 : i32
    %c0_i32_0 = arith.constant 0 : i32
    %c0_i32_1 = arith.constant 0 : i32
    return %c0_i32, %c0_i32_0 : i32, i32
  }
  func.func @transform_4(%arg0: i32) -> (i32, i32) {
    %c0_i32 = arith.constant 0 : i32
    %c0_i32_0 = arith.constant 0 : i32
    %c0_i32_1 = arith.constant 0 : i32
    return %c0_i32, %c0_i32_0 : i32, i32
  }
  func.func @transform_5(%arg0: i32) -> (i32, i32) {
    %c0_i32 = arith.constant 0 : i32
    %c0_i32_0 = arith.constant 0 : i32
    %c0_i32_1 = arith.constant 0 : i32
    return %c0_i32, %c0_i32_0 : i32, i32
  }
  func.func @transform_6(%arg0: i32) -> (i32, i32) {
    %c0_i32 = arith.constant 0 : i32
    %c0_i32_0 = arith.constant 0 : i32
    %c0_i32_1 = arith.constant 0 : i32
    return %c0_i32, %c0_i32_0 : i32, i32
  }
  func.func @transform_7(%arg0: i32) -> (i32, i32) {
    %c0_i32 = arith.constant 0 : i32
    %c0_i32_0 = arith.constant 0 : i32
    return %arg0, %c0_i32 : i32, i32
  }
}

</mosaic_0001>

<llo_original>
// kernel: mlp_forward.1
$region0: #{mlp_forward.1}
  #allocation0 [shape = 'u32[]', space=smem, size = 0x4, offset = 0x4, fixed_abs, tag = 'smem constant byte address 0x4 - core index']
  #allocation1 [shape = 'u32[144,128]{1,0:T(1,128)}', space=vmem, size = 0x12000, scoped, tag = 'internal scratch']
  %s0 = inlined_call_operand.vmem [shape: bf16[8,896], index: 0, kind: input, shape index: {}]
  %s1 = inlined_call_operand.vmem [shape: bf16[896,256], index: 1, kind: input, shape index: {}]
  %s2 = inlined_call_operand.vmem [shape: f32[1,256], index: 2, kind: input, shape index: {}]
  %s3 = inlined_call_operand.vmem [shape: bf16[256,256], index: 3, kind: input, shape index: {}]
  %s4 = inlined_call_operand.vmem [shape: f32[1,256], index: 4, kind: input, shape index: {}]
  %s5 = inlined_call_operand.vmem [shape: bf16[256,128], index: 5, kind: input, shape index: {}]
  %s6 = inlined_call_operand.vmem [shape: f32[1,128], index: 6, kind: input, shape index: {}]
  %s7 = inlined_call_operand.vmem [shape: f32[8,128], index: 7, kind: output, shape index: {}]
  %s8 = sld [smem:[#allocation0]]
  $region38: #{mlp_forward.1} parent=0
    _
  %s10 = ssub.s32 1, %s8
  %s11 = scalar_select 0, %s10, %s8
  // Predicated region
  $region2: #{mlp_forward.1} parent=0 // pred_check
    _
  $region3: #{mlp_forward.1} parent=0 // pred_check_branch
    %13 = sbr.rel (0) target = $region5
  $region4: #{mlp_forward.1} parent=0 // pred_region
    _
  $region5: #{mlp_forward.1} parent=0 // pred_fallthru
    _
  // Predicated region
  $region6: #{mlp_forward.1} parent=0 // pred_check
    _
  $region7: #{mlp_forward.1} parent=0 // pred_check_branch
    %15 = sbr.rel (0) target = $region9
  $region8: #{mlp_forward.1} parent=0 // pred_region
    _
  $region9: #{mlp_forward.1} parent=0 // pred_fallthru
    _
  // Predicated region
  $region10: #{mlp_forward.1} parent=0 // pred_check
    _
  $region11: #{mlp_forward.1} parent=0 // pred_check_branch
    %17 = sbr.rel (0) target = $region13
  $region12: #{mlp_forward.1} parent=0 // pred_region
    _
  $region13: #{mlp_forward.1} parent=0 // pred_fallthru
    _
  // Predicated region
  $region14: #{mlp_forward.1} parent=0 // pred_check
    _
  $region15: #{mlp_forward.1} parent=0 // pred_check_branch
    %19 = sbr.rel (0) target = $region17
  $region16: #{mlp_forward.1} parent=0 // pred_region
    _
  $region17: #{mlp_forward.1} parent=0 // pred_fallthru
    _
  // Predicated region
  $region18: #{mlp_forward.1} parent=0 // pred_check
    _
  $region19: #{mlp_forward.1} parent=0 // pred_check_branch
    %21 = sbr.rel (0) target = $region21
  $region20: #{mlp_forward.1} parent=0 // pred_region
    _
  $region21: #{mlp_forward.1} parent=0 // pred_fallthru
    _
  // Predicated region
  $region22: #{mlp_forward.1} parent=0 // pred_check
    _
  $region23: #{mlp_forward.1} parent=0 // pred_check_branch
    %23 = sbr.rel (0) target = $region25
  $region24: #{mlp_forward.1} parent=0 // pred_region
    _
  $region25: #{mlp_forward.1} parent=0 // pred_fallthru
    _
  // Predicated region
  $region26: #{mlp_forward.1} parent=0 // pred_check
    _
  $region27: #{mlp_forward.1} parent=0 // pred_check_branch
    %25 = sbr.rel (0) target = $region29
  $region28: #{mlp_forward.1} parent=0 // pred_region
    _
  $region29: #{mlp_forward.1} parent=0 // pred_fallthru
    _
  %v27 = vld [vmem:[%s0] sm:$0xff]
  %v28 = vld [vmem:[%s0 + $0x8] sm:$0xff]
  %v29 = vld [vmem:[%s0 + $0x10] sm:$0xff]
  %v30 = vld [vmem:[%s0 + $0x18] sm:$0xf]
  %v31 = vld [vmem:[%s1] sm:$0xff]
  %v32 = vld [vmem:[%s1 + $0x8] sm:$0xff]
  %v33 = vld [vmem:[%s1 + $0x10] sm:$0xff]
  %v34 = vld [vmem:[%s1 + $0x18] sm:$0xff]
  %v35 = vld [vmem:[%s1 + $0x20] sm:$0xff]
  %v36 = vld [vmem:[%s1 + $0x28] sm:$0xff]
  %v37 = vld [vmem:[%s1 + $0x30] sm:$0xff]
  %v38 = vld [vmem:[%s1 + $0x38] sm:$0xff]
  %v39 = vld [vmem:[%s1 + $0x40] sm:$0xff]
  %v40 = vld [vmem:[%s1 + $0x48] sm:$0xff]
  %v41 = vld [vmem:[%s1 + $0x50] sm:$0xff]
  %v42 = vld [vmem:[%s1 + $0x58] sm:$0xff]
  %v43 = vld [vmem:[%s1 + $0x60] sm:$0xff]
  %v44 = vld [vmem:[%s1 + $0x68] sm:$0xff]
  %v45 = vld [vmem:[%s1 + $0x70] sm:$0xff]
  %v46 = vld [vmem:[%s1 + $0x78] sm:$0xff]
  %v47 = vld [vmem:[%s1 + $0x80] sm:$0xff]
  %v48 = vld [vmem:[%s1 + $0x88] sm:$0xff]
  %v49 = vld [vmem:[%s1 + $0x90] sm:$0xff]
  %v50 = vld [vmem:[%s1 + $0x98] sm:$0xff]
  %v51 = vld [vmem:[%s1 + $0xa0] sm:$0xff]
  %v52 = vld [vmem:[%s1 + $0xa8] sm:$0xff]
  %v53 = vld [vmem:[%s1 + $0xb0] sm:$0xff]
  %v54 = vld [vmem:[%s1 + $0xb8] sm:$0xff]
  %v55 = vld [vmem:[%s1 + $0xc0] sm:$0xff]
  %v56 = vld [vmem:[%s1 + $0xc8] sm:$0xff]
  %v57 = vld [vmem:[%s1 + $0xd0] sm:$0xff]
  %v58 = vld [vmem:[%s1 + $0xd8] sm:$0xff]
  %v59 = vld [vmem:[%s1 + $0xe0] sm:$0xff]
  %v60 = vld [vmem:[%s1 + $0xe8] sm:$0xff]
  %v61 = vld [vmem:[%s1 + $0xf0] sm:$0xff]
  %v62 = vld [vmem:[%s1 + $0xf8] sm:$0xff]
  %v63 = vld [vmem:[%s1 + $0x100] sm:$0xff]
  %v64 = vld [vmem:[%s1 + $0x108] sm:$0xff]
  %v65 = vld [vmem:[%s1 + $0x110] sm:$0xff]
  %v66 = vld [vmem:[%s1 + $0x118] sm:$0xff]
  %v67 = vld [vmem:[%s1 + $0x120] sm:$0xff]
  %v68 = vld [vmem:[%s1 + $0x128] sm:$0xff]
  %v69 = vld [vmem:[%s1 + $0x130] sm:$0xff]
  %v70 = vld [vmem:[%s1 + $0x138] sm:$0xff]
  %v71 = vld [vmem:[%s1 + $0x140] sm:$0xff]
  %v72 = vld [vmem:[%s1 + $0x148] sm:$0xff]
  %v73 = vld [vmem:[%s1 + $0x150] sm:$0xff]
  %v74 = vld [vmem:[%s1 + $0x158] sm:$0xff]
  %v75 = vld [vmem:[%s1 + $0x160] sm:$0xff]
  %v76 = vld [vmem:[%s1 + $0x168] sm:$0xff]
  %v77 = vld [vmem:[%s1 + $0x170] sm:$0xff]
  %v78 = vld [vmem:[%s1 + $0x178] sm:$0xff]
  %v79 = vld [vmem:[%s1 + $0x180] sm:$0xff]
  %v80 = vld [vmem:[%s1 + $0x188] sm:$0xff]
  %v81 = vld [vmem:[%s1 + $0x190] sm:$0xff]
  %v82 = vld [vmem:[%s1 + $0x198] sm:$0xff]
  %v83 = vld [vmem:[%s1 + $0x1a0] sm:$0xff]
  %v84 = vld [vmem:[%s1 + $0x1a8] sm:$0xff]
  %v85 = vld [vmem:[%s1 + $0x1b0] sm:$0xff]
  %v86 = vld [vmem:[%s1 + $0x1b8] sm:$0xff]
  %v87 = vld [vmem:[%s1 + $0x1c0] sm:$0xff]
  %v88 = vld [vmem:[%s1 + $0x1c8] sm:$0xff]
  %v89 = vld [vmem:[%s1 + $0x1d0] sm:$0xff]
  %v90 = vld [vmem:[%s1 + $0x1d8] sm:$0xff]
  %v91 = vld [vmem:[%s1 + $0x1e0] sm:$0xff]
  %v92 = vld [vmem:[%s1 + $0x1e8] sm:$0xff]
  %v93 = vld [vmem:[%s1 + $0x1f0] sm:$0xff]
  %v94 = vld [vmem:[%s1 + $0x1f8] sm:$0xff]
  %v95 = vld [vmem:[%s1 + $0x200] sm:$0xff]
  %v96 = vld [vmem:[%s1 + $0x208] sm:$0xff]
  %v97 = vld [vmem:[%s1 + $0x210] sm:$0xff]
  %v98 = vld [vmem:[%s1 + $0x218] sm:$0xff]
  %v99 = vld [vmem:[%s1 + $0x220] sm:$0xff]
  %v100 = vld [vmem:[%s1 + $0x228] sm:$0xff]
  %v101 = vld [vmem:[%s1 + $0x230] sm:$0xff]
  %v102 = vld [vmem:[%s1 + $0x238] sm:$0xff]
  %v103 = vld [vmem:[%s1 + $0x240] sm:$0xff]
  %v104 = vld [vmem:[%s1 + $0x248] sm:$0xff]
  %v105 = vld [vmem:[%s1 + $0x250] sm:$0xff]
  %v106 = vld [vmem:[%s1 + $0x258] sm:$0xff]
  %v107 = vld [vmem:[%s1 + $0x260] sm:$0xff]
  %v108 = vld [vmem:[%s1 + $0x268] sm:$0xff]
  %v109 = vld [vmem:[%s1 + $0x270] sm:$0xff]
  %v110 = vld [vmem:[%s1 + $0x278] sm:$0xff]
  %v111 = vld [vmem:[%s1 + $0x280] sm:$0xff]
  %v112 = vld [vmem:[%s1 + $0x288] sm:$0xff]
  %v113 = vld [vmem:[%s1 + $0x290] sm:$0xff]
  %v114 = vld [vmem:[%s1 + $0x298] sm:$0xff]
  %v115 = vld [vmem:[%s1 + $0x2a0] sm:$0xff]
  %v116 = vld [vmem:[%s1 + $0x2a8] sm:$0xff]
  %v117 = vld [vmem:[%s1 + $0x2b0] sm:$0xff]
  %v118 = vld [vmem:[%s1 + $0x2b8] sm:$0xff]
  %v119 = vld [vmem:[%s1 + $0x2c0] sm:$0xff]
  %v120 = vld [vmem:[%s1 + $0x2c8] sm:$0xff]
  %v121 = vld [vmem:[%s1 + $0x2d0] sm:$0xff]
  %v122 = vld [vmem:[%s1 + $0x2d8] sm:$0xff]
  %v123 = vld [vmem:[%s1 + $0x2e0] sm:$0xff]
  %v124 = vld [vmem:[%s1 + $0x2e8] sm:$0xff]
  %v125 = vld [vmem:[%s1 + $0x2f0] sm:$0xff]
  %v126 = vld [vmem:[%s1 + $0x2f8] sm:$0xff]
  %v127 = vld [vmem:[%s1 + $0x300] sm:$0xff]
  %v128 = vld [vmem:[%s1 + $0x308] sm:$0xff]
  %v129 = vld [vmem:[%s1 + $0x310] sm:$0xff]
  %v130 = vld [vmem:[%s1 + $0x318] sm:$0xff]
  %v131 = vld [vmem:[%s1 + $0x320] sm:$0xff]
  %v132 = vld [vmem:[%s1 + $0x328] sm:$0xff]
  %v133 = vld [vmem:[%s1 + $0x330] sm:$0xff]
  %v134 = vld [vmem:[%s1 + $0x338] sm:$0xff]
  %v135 = vld [vmem:[%s1 + $0x340] sm:$0xff]
  %v136 = vld [vmem:[%s1 + $0x348] sm:$0xff]
  %v137 = vld [vmem:[%s1 + $0x350] sm:$0xff]
  %v138 = vld [vmem:[%s1 + $0x358] sm:$0xff]
  %v139 = vld [vmem:[%s1 + $0x360] sm:$0xff]
  %v140 = vld [vmem:[%s1 + $0x368] sm:$0xff]
  %v141 = vld [vmem:[%s1 + $0x370] sm:$0xff]
  %v142 = vld [vmem:[%s1 + $0x378] sm:$0xff]
  %v143 = vld [vmem:[%s2] sm:$0x3]
  %v145 = vlaneseq
  %v146 = vshrl.u32 %v145, 7
  %v147 = vsub.s32 0, %v146
  %v148 = vrot.slane %v143, %v147
  %v149 = vlaneseq
  %v150 = vshrl.u32 %v149, 7
  %v151 = vsub.s32 1, %v150
  %v152 = vrot.slane %v143, %v151
  %v159 = vunpack.c.l.b16 %v27
  %v160 = vunpack.c.h.b16 %v27
  %v161 = vunpack.c.l.b16 %v28
  %v162 = vunpack.c.h.b16 %v28
  %v163 = vunpack.c.l.b16 %v29
  %v164 = vunpack.c.h.b16 %v29
  %v165 = vunpack.c.l.b16 %v30
  %v166 = vpack.c.b16 %v159, %v159
  %v167 = vpack.c.b16 %v160, %v160
  %v168 = vpack.c.b16 %v161, %v161
  %v169 = vpack.c.b16 %v162, %v162
  %v170 = vpack.c.b16 %v163, %v163
  %v171 = vpack.c.b16 %v164, %v164
  %v172 = vpack.c.b16 %v165, %v165
  %v292 = vunpack.c.l.b16 %v31
  %v293 = vunpack.c.h.b16 %v31
  %v294 = vunpack.c.l.b16 %v32
  %v295 = vunpack.c.h.b16 %v32
  %v296 = vunpack.c.l.b16 %v33
  %v297 = vunpack.c.h.b16 %v33
  %v298 = vunpack.c.l.b16 %v34
  %v299 = vunpack.c.h.b16 %v34
  %v300 = vunpack.c.l.b16 %v35
  %v301 = vunpack.c.h.b16 %v35
  %v302 = vunpack.c.l.b16 %v36
  %v303 = vunpack.c.h.b16 %v36
  %v304 = vunpack.c.l.b16 %v37
  %v305 = vunpack.c.h.b16 %v37
  %v306 = vunpack.c.l.b16 %v38
  %v307 = vunpack.c.h.b16 %v38
  %v308 = vunpack.c.l.b16 %v39
  %v309 = vunpack.c.h.b16 %v39
  %v310 = vunpack.c.l.b16 %v40
  %v311 = vunpack.c.h.b16 %v40
  %v312 = vunpack.c.l.b16 %v41
  %v313 = vunpack.c.h.b16 %v41
  %v314 = vunpack.c.l.b16 %v42
  %v315 = vunpack.c.h.b16 %v42
  %v316 = vunpack.c.l.b16 %v43
  %v317 = vunpack.c.h.b16 %v43
  %v318 = vunpack.c.l.b16 %v44
  %v319 = vunpack.c.h.b16 %v44
  %v320 = vunpack.c.l.b16 %v45
  %v321 = vunpack.c.h.b16 %v45
  %v322 = vunpack.c.l.b16 %v46
  %v323 = vunpack.c.h.b16 %v46
  %v324 = vunpack.c.l.b16 %v47
  %v325 = vunpack.c.h.b16 %v47
  %v326 = vunpack.c.l.b16 %v48
  %v327 = vunpack.c.h.b16 %v48
  %v328 = vunpack.c.l.b16 %v49
  %v329 = vunpack.c.h.b16 %v49
  %v330 = vunpack.c.l.b16 %v50
  %v331 = vunpack.c.h.b16 %v50
  %v332 = vunpack.c.l.b16 %v51
  %v333 = vunpack.c.h.b16 %v51
  %v334 = vunpack.c.l.b16 %v52
  %v335 = vunpack.c.h.b16 %v52
  %v336 = vunpack.c.l.b16 %v53
  %v337 = vunpack.c.h.b16 %v53
  %v338 = vunpack.c.l.b16 %v54
  %v339 = vunpack.c.h.b16 %v54
  %v340 = vunpack.c.l.b16 %v55
  %v341 = vunpack.c.h.b16 %v55
  %v342 = vunpack.c.l.b16 %v56
  %v343 = vunpack.c.h.b16 %v56
  %v344 = vunpack.c.l.b16 %v57
  %v345 = vunpack.c.h.b16 %v57
  %v346 = vunpack.c.l.b16 %v58
  %v347 = vunpack.c.h.b16 %v58
  %v348 = vunpack.c.l.b16 %v59
  %v349 = vunpack.c.h.b16 %v59
  %v350 = vunpack.c.l.b16 %v60
  %v351 = vunpack.c.h.b16 %v60
  %v352 = vunpack.c.l.b16 %v61
  %v353 = vunpack.c.h.b16 %v61
  %v354 = vunpack.c.l.b16 %v62
  %v355 = vunpack.c.h.b16 %v62
  %v356 = vunpack.c.l.b16 %v63
  %v357 = vunpack.c.h.b16 %v63
  %v358 = vunpack.c.l.b16 %v64
  %v359 = vunpack.c.h.b16 %v64
  %v360 = vunpack.c.l.b16 %v65
  %v361 = vunpack.c.h.b16 %v65
  %v362 = vunpack.c.l.b16 %v66
  %v363 = vunpack.c.h.b16 %v66
  %v364 = vunpack.c.l.b16 %v67
  %v365 = vunpack.c.h.b16 %v67
  %v366 = vunpack.c.l.b16 %v68
  %v367 = vunpack.c.h.b16 %v68
  %v368 = vunpack.c.l.b16 %v69
  %v369 = vunpack.c.h.b16 %v69
  %v370 = vunpack.c.l.b16 %v70
  %v371 = vunpack.c.h.b16 %v70
  %v372 = vunpack.c.l.b16 %v71
  %v373 = vunpack.c.h.b16 %v71
  %v374 = vunpack.c.l.b16 %v72
  %v375 = vunpack.c.h.b16 %v72
  %v376 = vunpack.c.l.b16 %v73
  %v377 = vunpack.c.h.b16 %v73
  %v378 = vunpack.c.l.b16 %v74
  %v379 = vunpack.c.h.b16 %v74
  %v380 = vunpack.c.l.b16 %v75
  %v381 = vunpack.c.h.b16 %v75
  %v382 = vunpack.c.l.b16 %v76
  %v383 = vunpack.c.h.b16 %v76
  %v384 = vunpack.c.l.b16 %v77
  %v385 = vunpack.c.h.b16 %v77
  %v386 = vunpack.c.l.b16 %v78
  %v387 = vunpack.c.h.b16 %v78
  %v388 = vunpack.c.l.b16 %v79
  %v389 = vunpack.c.h.b16 %v79
  %v390 = vunpack.c.l.b16 %v80
  %v391 = vunpack.c.h.b16 %v80
  %v392 = vunpack.c.l.b16 %v81
  %v393 = vunpack.c.h.b16 %v81
  %v394 = vunpack.c.l.b16 %v82
  %v395 = vunpack.c.h.b16 %v82
  %v396 = vunpack.c.l.b16 %v83
  %v397 = vunpack.c.h.b16 %v83
  %v398 = vunpack.c.l.b16 %v84
  %v399 = vunpack.c.h.b16 %v84
  %v400 = vunpack.c.l.b16 %v85
  %v401 = vunpack.c.h.b16 %v85
  %v402 = vunpack.c.l.b16 %v86
  %v403 = vunpack.c.h.b16 %v86
  %v404 = vunpack.c.l.b16 %v87
  %v405 = vunpack.c.h.b16 %v87
  %v406 = vunpack.c.l.b16 %v88
  %v407 = vunpack.c.h.b16 %v88
  %v408 = vunpack.c.l.b16 %v89
  %v409 = vunpack.c.h.b16 %v89
  %v410 = vunpack.c.l.b16 %v90
  %v411 = vunpack.c.h.b16 %v90
  %v412 = vunpack.c.l.b16 %v91
  %v413 = vunpack.c.h.b16 %v91
  %v414 = vunpack.c.l.b16 %v92
  %v415 = vunpack.c.h.b16 %v92
  %v416 = vunpack.c.l.b16 %v93
  %v417 = vunpack.c.h.b16 %v93
  %v418 = vunpack.c.l.b16 %v94
  %v419 = vunpack.c.h.b16 %v94
  %v420 = vunpack.c.l.b16 %v95
  %v421 = vunpack.c.h.b16 %v95
  %v422 = vunpack.c.l.b16 %v96
  %v423 = vunpack.c.h.b16 %v96
  %v424 = vunpack.c.l.b16 %v97
  %v425 = vunpack.c.h.b16 %v97
  %v426 = vunpack.c.l.b16 %v98
  %v427 = vunpack.c.h.b16 %v98
  %v428 = vunpack.c.l.b16 %v99
  %v429 = vunpack.c.h.b16 %v99
  %v430 = vunpack.c.l.b16 %v100
  %v431 = vunpack.c.h.b16 %v100
  %v432 = vunpack.c.l.b16 %v101
  %v433 = vunpack.c.h.b16 %v101
  %v434 = vunpack.c.l.b16 %v102
  %v435 = vunpack.c.h.b16 %v102
  %v436 = vunpack.c.l.b16 %v103
  %v437 = vunpack.c.h.b16 %v103
  %v438 = vunpack.c.l.b16 %v104
  %v439 = vunpack.c.h.b16 %v104
  %v440 = vunpack.c.l.b16 %v105
  %v441 = vunpack.c.h.b16 %v105
  %v442 = vunpack.c.l.b16 %v106
  %v443 = vunpack.c.h.b16 %v106
  %v444 = vunpack.c.l.b16 %v107
  %v445 = vunpack.c.h.b16 %v107
  %v446 = vunpack.c.l.b16 %v108
  %v447 = vunpack.c.h.b16 %v108
  %v448 = vunpack.c.l.b16 %v109
  %v449 = vunpack.c.h.b16 %v109
  %v450 = vunpack.c.l.b16 %v110
  %v451 = vunpack.c.h.b16 %v110
  %v452 = vunpack.c.l.b16 %v111
  %v453 = vunpack.c.h.b16 %v111
  %v454 = vunpack.c.l.b16 %v112
  %v455 = vunpack.c.h.b16 %v112
  %v456 = vunpack.c.l.b16 %v113
  %v457 = vunpack.c.h.b16 %v113
  %v458 = vunpack.c.l.b16 %v114
  %v459 = vunpack.c.h.b16 %v114
  %v460 = vunpack.c.l.b16 %v115
  %v461 = vunpack.c.h.b16 %v115
  %v462 = vunpack.c.l.b16 %v116
  %v463 = vunpack.c.h.b16 %v116
  %v464 = vunpack.c.l.b16 %v117
  %v465 = vunpack.c.h.b16 %v117
  %v466 = vunpack.c.l.b16 %v118
  %v467 = vunpack.c.h.b16 %v118
  %v468 = vunpack.c.l.b16 %v119
  %v469 = vunpack.c.h.b16 %v119
  %v470 = vunpack.c.l.b16 %v120
  %v471 = vunpack.c.h.b16 %v120
  %v472 = vunpack.c.l.b16 %v121
  %v473 = vunpack.c.h.b16 %v121
  %v474 = vunpack.c.l.b16 %v122
  %v475 = vunpack.c.h.b16 %v122
  %v476 = vunpack.c.l.b16 %v123
  %v477 = vunpack.c.h.b16 %v123
  %v478 = vunpack.c.l.b16 %v124
  %v479 = vunpack.c.h.b16 %v124
  %v480 = vunpack.c.l.b16 %v125
  %v481 = vunpack.c.h.b16 %v125
  %v482 = vunpack.c.l.b16 %v126
  %v483 = vunpack.c.h.b16 %v126
  %v484 = vunpack.c.l.b16 %v127
  %v485 = vunpack.c.h.b16 %v127
  %v486 = vunpack.c.l.b16 %v128
  %v487 = vunpack.c.h.b16 %v128
  %v488 = vunpack.c.l.b16 %v129
  %v489 = vunpack.c.h.b16 %v129
  %v490 = vunpack.c.l.b16 %v130
  %v491 = vunpack.c.h.b16 %v130
  %v492 = vunpack.c.l.b16 %v131
  %v493 = vunpack.c.h.b16 %v131
  %v494 = vunpack.c.l.b16 %v132
  %v495 = vunpack.c.h.b16 %v132
  %v496 = vunpack.c.l.b16 %v133
  %v497 = vunpack.c.h.b16 %v133
  %v498 = vunpack.c.l.b16 %v134
  %v499 = vunpack.c.h.b16 %v134
  %v500 = vunpack.c.l.b16 %v135
  %v501 = vunpack.c.h.b16 %v135
  %v502 = vunpack.c.l.b16 %v136
  %v503 = vunpack.c.h.b16 %v136
  %v504 = vunpack.c.l.b16 %v137
  %v505 = vunpack.c.h.b16 %v137
  %v506 = vunpack.c.l.b16 %v138
  %v507 = vunpack.c.h.b16 %v138
  %v508 = vunpack.c.l.b16 %v139
  %v509 = vunpack.c.h.b16 %v139
  %v510 = vunpack.c.l.b16 %v140
  %v511 = vunpack.c.h.b16 %v140
  %v512 = vunpack.c.l.b16 %v141
  %v513 = vunpack.c.h.b16 %v141
  %v514 = vunpack.c.l.b16 %v142
  %v515 = vunpack.c.h.b16 %v142
  %v516 = vpack.c.b16 %v294, %v292
  %v517 = vpack.c.b16 %v295, %v293
  %v518 = vpack.c.b16 %v298, %v296
  %v519 = vpack.c.b16 %v299, %v297
  %v520 = vpack.c.b16 %v302, %v300
  %v521 = vpack.c.b16 %v303, %v301
  %v522 = vpack.c.b16 %v306, %v304
  %v523 = vpack.c.b16 %v307, %v305
  %v524 = vpack.c.b16 %v310, %v308
  %v525 = vpack.c.b16 %v311, %v309
  %v526 = vpack.c.b16 %v314, %v312
  %v527 = vpack.c.b16 %v315, %v313
  %v528 = vpack.c.b16 %v318, %v316
  %v529 = vpack.c.b16 %v319, %v317
  %v530 = vpack.c.b16 %v322, %v320
  %v531 = vpack.c.b16 %v323, %v321
  %v532 = vpack.c.b16 %v326, %v324
  %v533 = vpack.c.b16 %v327, %v325
  %v534 = vpack.c.b16 %v330, %v328
  %v535 = vpack.c.b16 %v331, %v329
  %v536 = vpack.c.b16 %v334, %v332
  %v537 = vpack.c.b16 %v335, %v333
  %v538 = vpack.c.b16 %v338, %v336
  %v539 = vpack.c.b16 %v339, %v337
  %v540 = vpack.c.b16 %v342, %v340
  %v541 = vpack.c.b16 %v343, %v341
  %v542 = vpack.c.b16 %v346, %v344
  %v543 = vpack.c.b16 %v347, %v345
  %v544 = vpack.c.b16 %v350, %v348
  %v545 = vpack.c.b16 %v351, %v349
  %v546 = vpack.c.b16 %v354, %v352
  %v547 = vpack.c.b16 %v355, %v353
  %v548 = vpack.c.b16 %v358, %v356
  %v549 = vpack.c.b16 %v359, %v357
  %v550 = vpack.c.b16 %v362, %v360
  %v551 = vpack.c.b16 %v363, %v361
  %v552 = vpack.c.b16 %v366, %v364
  %v553 = vpack.c.b16 %v367, %v365
  %v554 = vpack.c.b16 %v370, %v368
  %v555 = vpack.c.b16 %v371, %v369
  %v556 = vpack.c.b16 %v374, %v372
  %v557 = vpack.c.b16 %v375, %v373
  %v558 = vpack.c.b16 %v378, %v376
  %v559 = vpack.c.b16 %v379, %v377
  %v560 = vpack.c.b16 %v382, %v380
  %v561 = vpack.c.b16 %v383, %v381
  %v562 = vpack.c.b16 %v386, %v384
  %v563 = vpack.c.b16 %v387, %v385
  %v564 = vpack.c.b16 %v390, %v388
  %v565 = vpack.c.b16 %v391, %v389
  %v566 = vpack.c.b16 %v394, %v392
  %v567 = vpack.c.b16 %v395, %v393
  %v568 = vpack.c.b16 %v398, %v396
  %v569 = vpack.c.b16 %v399, %v397
  %v570 = vpack.c.b16 %v402, %v400
  %v571 = vpack.c.b16 %v403, %v401
  %v572 = vpack.c.b16 %v406, %v404
  %v573 = vpack.c.b16 %v407, %v405
  %v574 = vpack.c.b16 %v410, %v408
  %v575 = vpack.c.b16 %v411, %v409
  %v576 = vpack.c.b16 %v414, %v412
  %v577 = vpack.c.b16 %v415, %v413
  %v578 = vpack.c.b16 %v418, %v416
  %v579 = vpack.c.b16 %v419, %v417
  %v580 = vpack.c.b16 %v422, %v420
  %v581 = vpack.c.b16 %v423, %v421
  %v582 = vpack.c.b16 %v426, %v424
  %v583 = vpack.c.b16 %v427, %v425
  %v584 = vpack.c.b16 %v430, %v428
  %v585 = vpack.c.b16 %v431, %v429
  %v586 = vpack.c.b16 %v434, %v432
  %v587 = vpack.c.b16 %v435, %v433
  %v588 = vpack.c.b16 %v438, %v436
  %v589 = vpack.c.b16 %v439, %v437
  %v590 = vpack.c.b16 %v442, %v440
  %v591 = vpack.c.b16 %v443, %v441
  %v592 = vpack.c.b16 %v446, %v444
  %v593 = vpack.c.b16 %v447, %v445
  %v594 = vpack.c.b16 %v450, %v448
  %v595 = vpack.c.b16 %v451, %v449
  %v596 = vpack.c.b16 %v454, %v452
  %v597 = vpack.c.b16 %v455, %v453
  %v598 = vpack.c.b16 %v458, %v456
  %v599 = vpack.c.b16 %v459, %v457
  %v600 = vpack.c.b16 %v462, %v460
  %v601 = vpack.c.b16 %v463, %v461
  %v602 = vpack.c.b16 %v466, %v464
  %v603 = vpack.c.b16 %v467, %v465
  %v604 = vpack.c.b16 %v470, %v468
  %v605 = vpack.c.b16 %v471, %v469
  %v606 = vpack.c.b16 %v474, %v472
  %v607 = vpack.c.b16 %v475, %v473
  %v608 = vpack.c.b16 %v478, %v476
  %v609 = vpack.c.b16 %v479, %v477
  %v610 = vpack.c.b16 %v482, %v480
  %v611 = vpack.c.b16 %v483, %v481
  %v612 = vpack.c.b16 %v486, %v484
  %v613 = vpack.c.b16 %v487, %v485
  %v614 = vpack.c.b16 %v490, %v488
  %v615 = vpack.c.b16 %v491, %v489
  %v616 = vpack.c.b16 %v494, %v492
  %v617 = vpack.c.b16 %v495, %v493
  %v618 = vpack.c.b16 %v498, %v496
  %v619 = vpack.c.b16 %v499, %v497
  %v620 = vpack.c.b16 %v502, %v500
  %v621 = vpack.c.b16 %v503, %v501
  %v622 = vpack.c.b16 %v506, %v504
  %v623 = vpack.c.b16 %v507, %v505
  %v624 = vpack.c.b16 %v510, %v508
  %v625 = vpack.c.b16 %v511, %v509
  %v626 = vpack.c.b16 %v514, %v512
  %v627 = vpack.c.b16 %v515, %v513
  %740 = vmatprep.subr.bf16.mxu0 %v531
  %741 = vmatpush1.bf16.msra.mxu0 %v530
  %742 = vmatprep.subr.bf16.mxu0 %v529
  %743 = vmatpush1.bf16.msra.mxu0 %v528
  %744 = vmatprep.subr.bf16.mxu0 %v527
  %745 = vmatpush1.bf16.msra.mxu0 %v526
  %746 = vmatprep.subr.bf16.mxu0 %v525
  %747 = vmatpush1.bf16.msra.mxu0 %v524
  %748 = vmatprep.subr.bf16.mxu0 %v523
  %749 = vmatpush1.bf16.msra.mxu0 %v522
  %750 = vmatprep.subr.bf16.mxu0 %v521
  %751 = vmatpush1.bf16.msra.mxu0 %v520
  %752 = vmatprep.subr.bf16.mxu0 %v519
  %753 = vmatpush1.bf16.msra.mxu0 %v518
  %754 = vmatprep.subr.bf16.mxu0 %v517
  %755 = vmatpush1.bf16.msra.mxu0 %v516
  %756 = vmatprep.subr.bf16.mxu0 %v547
  %757 = vmatpush2.bf16.msra.mxu0 %v546
  %758 = vmatprep.subr.bf16.mxu0 %v545
  %759 = vmatpush2.bf16.msra.mxu0 %v544
  %760 = vmatprep.subr.bf16.mxu0 %v543
  %761 = vmatpush2.bf16.msra.mxu0 %v542
  %762 = vmatprep.subr.bf16.mxu0 %v541
  %763 = vmatpush2.bf16.msra.mxu0 %v540
  %764 = vmatprep.subr.bf16.mxu0 %v539
  %765 = vmatpush2.bf16.msra.mxu0 %v538
  %766 = vmatprep.subr.bf16.mxu0 %v537
  %767 = vmatpush2.bf16.msra.mxu0 %v536
  %768 = vmatprep.subr.bf16.mxu0 %v535
  %769 = vmatpush2.bf16.msra.mxu0 %v534
  %770 = vmatprep.subr.bf16.mxu0 %v533
  %771 = vmatpush2.bf16.msra.mxu0 %v532
  %772 = vmatprep.mubr.bf16.mxu0 %v167
  %773 = vmatmul.mubr.bf16.gmra.mxu0 %v166
  %v774 = vpop.f32.mrf.mxu0
  %v775 = vadd.f32 %v148, %v774
  %v776 = vpop.f32.mrf.mxu0
  %v777 = vadd.f32 %v152, %v776
  %v778 = vpop.f32.mrf.mxu0
  %v779 = vpop.f32.mrf.mxu0
  %780 = vdwg.mxu0
  %781 = vmatprep.subr.bf16.mxu0 %v563
  %782 = vmatpush1.bf16.msra.mxu0 %v562
  %783 = vmatprep.subr.bf16.mxu0 %v561
  %784 = vmatpush1.bf16.msra.mxu0 %v560
  %785 = vmatprep.subr.bf16.mxu0 %v559
  %786 = vmatpush1.bf16.msra.mxu0 %v558
  %787 = vmatprep.subr.bf16.mxu0 %v557
  %788 = vmatpush1.bf16.msra.mxu0 %v556
  %789 = vmatprep.subr.bf16.mxu0 %v555
  %790 = vmatpush1.bf16.msra.mxu0 %v554
  %791 = vmatprep.subr.bf16.mxu0 %v553
  %792 = vmatpush1.bf16.msra.mxu0 %v552
  %793 = vmatprep.subr.bf16.mxu0 %v551
  %794 = vmatpush1.bf16.msra.mxu0 %v550
  %795 = vmatprep.subr.bf16.mxu0 %v549
  %796 = vmatpush1.bf16.msra.mxu0 %v548
  %797 = vmatprep.subr.bf16.mxu0 %v579
  %798 = vmatpush2.bf16.msra.mxu0 %v578
  %799 = vmatprep.subr.bf16.mxu0 %v577
  %800 = vmatpush2.bf16.msra.mxu0 %v576
  %801 = vmatprep.subr.bf16.mxu0 %v575
  %802 = vmatpush2.bf16.msra.mxu0 %v574
  %803 = vmatprep.subr.bf16.mxu0 %v573
  %804 = vmatpush2.bf16.msra.mxu0 %v572
  %805 = vmatprep.subr.bf16.mxu0 %v571
  %806 = vmatpush2.bf16.msra.mxu0 %v570
  %807 = vmatprep.subr.bf16.mxu0 %v569
  %808 = vmatpush2.bf16.msra.mxu0 %v568
  %809 = vmatprep.subr.bf16.mxu0 %v567
  %810 = vmatpush2.bf16.msra.mxu0 %v566
  %811 = vmatprep.subr.bf16.mxu0 %v565
  %812 = vmatpush2.bf16.msra.mxu0 %v564
  %813 = vmatprep.mubr.bf16.mxu0 %v169
  %814 = vmatmul.mubr.bf16.gmra.mxu0 %v168
  %v815 = vpop.f32.mrf.mxu0
  %v816 = vadd.f32 %v775, %v815
  %v817 = vpop.f32.mrf.mxu0
  %v818 = vadd.f32 %v777, %v817
  %v819 = vpop.f32.mrf.mxu0
  %v820 = vpop.f32.mrf.mxu0
  %821 = vdwg.mxu0
  %822 = vmatprep.subr.bf16.mxu0 %v595
  %823 = vmatpush1.bf16.msra.mxu0 %v594
  %824 = vmatprep.subr.bf16.mxu0 %v593
  %825 = vmatpush1.bf16.msra.mxu0 %v592
  %826 = vmatprep.subr.bf16.mxu0 %v591
  %827 = vmatpush1.bf16.msra.mxu0 %v590
  %828 = vmatprep.subr.bf16.mxu0 %v589
  %829 = vmatpush1.bf16.msra.mxu0 %v588
  %830 = vmatprep.subr.bf16.mxu0 %v587
  %831 = vmatpush1.bf16.msra.mxu0 %v586
  %832 = vmatprep.subr.bf16.mxu0 %v585
  %833 = vmatpush1.bf16.msra.mxu0 %v584
  %834 = vmatprep.subr.bf16.mxu0 %v583
  %835 = vmatpush1.bf16.msra.mxu0 %v582
  %836 = vmatprep.subr.bf16.mxu0 %v581
  %837 = vmatpush1.bf16.msra.mxu0 %v580
  %838 = vmatprep.subr.bf16.mxu0 %v611
  %839 = vmatpush2.bf16.msra.mxu0 %v610
  %840 = vmatprep.subr.bf16.mxu0 %v609
  %841 = vmatpush2.bf16.msra.mxu0 %v608
  %842 = vmatprep.subr.bf16.mxu0 %v607
  %843 = vmatpush2.bf16.msra.mxu0 %v606
  %844 = vmatprep.subr.bf16.mxu0 %v605
  %845 = vmatpush2.bf16.msra.mxu0 %v604
  %846 = vmatprep.subr.bf16.mxu0 %v603
  %847 = vmatpush2.bf16.msra.mxu0 %v602
  %848 = vmatprep.subr.bf16.mxu0 %v601
  %849 = vmatpush2.bf16.msra.mxu0 %v600
  %850 = vmatprep.subr.bf16.mxu0 %v599
  %851 = vmatpush2.bf16.msra.mxu0 %v598
  %852 = vmatprep.subr.bf16.mxu0 %v597
  %853 = vmatpush2.bf16.msra.mxu0 %v596
  %854 = vmatprep.mubr.bf16.mxu0 %v171
  %855 = vmatmul.mubr.bf16.gmra.mxu0 %v170
  %v856 = vpop.f32.mrf.mxu0
  %v857 = vadd.f32 %v816, %v856
  %v858 = vpop.f32.mrf.mxu0
  %v859 = vadd.f32 %v818, %v858
  %v860 = vpop.f32.mrf.mxu0
  %v861 = vpop.f32.mrf.mxu0
  %862 = vdwg.mxu0
  %863 = vmatprep.subr.bf16.mxu0 %v627
  %864 = vmatpush1.bf16.msra.mxu0 %v626
  %865 = vmatprep.subr.bf16.mxu0 %v625
  %866 = vmatpush1.bf16.msra.mxu0 %v624
  %867 = vmatprep.subr.bf16.mxu0 %v623
  %868 = vmatpush1.bf16.msra.mxu0 %v622
  %869 = vmatprep.subr.bf16.mxu0 %v621
  %870 = vmatpush1.bf16.msra.mxu0 %v620
  %871 = vmatprep.subr.bf16.mxu0 %v619
  %872 = vmatpush1.bf16.msra.mxu0 %v618
  %873 = vmatprep.subr.bf16.mxu0 %v617
  %874 = vmatpush1.bf16.msra.mxu0 %v616
  %875 = vmatprep.subr.bf16.mxu0 %v615
  %876 = vmatpush1.bf16.msra.mxu0 %v614
  %877 = vmatprep.subr.bf16.mxu0 %v613
  %878 = vmatpush1.bf16.msra.mxu0 %v612
  %879 = vmatprep.subr.bf16.mxu0 0
  %880 = vmatpush2.bf16.msra.mxu0 0
  %881 = vmatprep.subr.bf16.mxu0 0
  %882 = vmatpush2.bf16.msra.mxu0 0
  %883 = vmatprep.subr.bf16.mxu0 0
  %884 = vmatpush2.bf16.msra.mxu0 0
  %885 = vmatprep.subr.bf16.mxu0 0
  %886 = vmatpush2.bf16.msra.mxu0 0
  %887 = vmatprep.subr.bf16.mxu0 0
  %888 = vmatpush2.bf16.msra.mxu0 0
  %889 = vmatprep.subr.bf16.mxu0 0
  %890 = vmatpush2.bf16.msra.mxu0 0
  %891 = vmatprep.subr.bf16.mxu0 0
  %892 = vmatpush2.bf16.msra.mxu0 0
  %893 = vmatprep.subr.bf16.mxu0 0
  %894 = vmatpush2.bf16.msra.mxu0 0
  %895 = vmatprep.mubr.bf16.mxu0 0
  %896 = vmatmul.mubr.bf16.gmra.mxu0 %v172
  %v897 = vpop.f32.mrf.mxu0
  %v898 = vadd.f32 %v857, %v897
  %v899 = vpop.f32.mrf.mxu0
  %v900 = vadd.f32 %v859, %v899
  %v901 = vpop.f32.mrf.mxu0
  %v902 = vpop.f32.mrf.mxu0
  %903 = vdwg.mxu0
  %v904 = vmax.f32 %v898, 0.0
  %v905 = vmax.f32 %v900, 0.0
  %v906 = vpack.c.bf16 %v904, %v904
  %v907 = vpack.c.bf16 %v905, %v905
  %v908 = vld [vmem:[%s3] sm:$0xff]
  %v909 = vld [vmem:[%s3 + $0x8] sm:$0xff]
  %v910 = vld [vmem:[%s3 + $0x10] sm:$0xff]
  %v911 = vld [vmem:[%s3 + $0x18] sm:$0xff]
  %v912 = vld [vmem:[%s3 + $0x20] sm:$0xff]
  %v913 = vld [vmem:[%s3 + $0x28] sm:$0xff]
  %v914 = vld [vmem:[%s3 + $0x30] sm:$0xff]
  %v915 = vld [vmem:[%s3 + $0x38] sm:$0xff]
  %v916 = vld [vmem:[%s3 + $0x40] sm:$0xff]
  %v917 = vld [vmem:[%s3 + $0x48] sm:$0xff]
  %v918 = vld [vmem:[%s3 + $0x50] sm:$0xff]
  %v919 = vld [vmem:[%s3 + $0x58] sm:$0xff]
  %v920 = vld [vmem:[%s3 + $0x60] sm:$0xff]
  %v921 = vld [vmem:[%s3 + $0x68] sm:$0xff]
  %v922 = vld [vmem:[%s3 + $0x70] sm:$0xff]
  %v923 = vld [vmem:[%s3 + $0x78] sm:$0xff]
  %v924 = vld [vmem:[%s3 + $0x80] sm:$0xff]
  %v925 = vld [vmem:[%s3 + $0x88] sm:$0xff]
  %v926 = vld [vmem:[%s3 + $0x90] sm:$0xff]
  %v927 = vld [vmem:[%s3 + $0x98] sm:$0xff]
  %v928 = vld [vmem:[%s3 + $0xa0] sm:$0xff]
  %v929 = vld [vmem:[%s3 + $0xa8] sm:$0xff]
  %v930 = vld [vmem:[%s3 + $0xb0] sm:$0xff]
  %v931 = vld [vmem:[%s3 + $0xb8] sm:$0xff]
  %v932 = vld [vmem:[%s3 + $0xc0] sm:$0xff]
  %v933 = vld [vmem:[%s3 + $0xc8] sm:$0xff]
  %v934 = vld [vmem:[%s3 + $0xd0] sm:$0xff]
  %v935 = vld [vmem:[%s3 + $0xd8] sm:$0xff]
  %v936 = vld [vmem:[%s3 + $0xe0] sm:$0xff]
  %v937 = vld [vmem:[%s3 + $0xe8] sm:$0xff]
  %v938 = vld [vmem:[%s3 + $0xf0] sm:$0xff]
  %v939 = vld [vmem:[%s3 + $0xf8] sm:$0xff]
  %v940 = vld [vmem:[%s4] sm:$0x3]
  %v942 = vlaneseq
  %v943 = vshrl.u32 %v942, 7
  %v944 = vsub.s32 0, %v943
  %v945 = vrot.slane %v940, %v944
  %v946 = vlaneseq
  %v947 = vshrl.u32 %v946, 7
  %v948 = vsub.s32 1, %v947
  %v949 = vrot.slane %v940, %v948
  %v984 = vunpack.c.l.b16 %v908
  %v985 = vunpack.c.h.b16 %v908
  %v986 = vunpack.c.l.b16 %v909
  %v987 = vunpack.c.h.b16 %v909
  %v988 = vunpack.c.l.b16 %v910
  %v989 = vunpack.c.h.b16 %v910
  %v990 = vunpack.c.l.b16 %v911
  %v991 = vunpack.c.h.b16 %v911
  %v992 = vunpack.c.l.b16 %v912
  %v993 = vunpack.c.h.b16 %v912
  %v994 = vunpack.c.l.b16 %v913
  %v995 = vunpack.c.h.b16 %v913
  %v996 = vunpack.c.l.b16 %v914
  %v997 = vunpack.c.h.b16 %v914
  %v998 = vunpack.c.l.b16 %v915
  %v999 = vunpack.c.h.b16 %v915
  %v1000 = vunpack.c.l.b16 %v916
  %v1001 = vunpack.c.h.b16 %v916
  %v1002 = vunpack.c.l.b16 %v917
  %v1003 = vunpack.c.h.b16 %v917
  %v1004 = vunpack.c.l.b16 %v918
  %v1005 = vunpack.c.h.b16 %v918
  %v1006 = vunpack.c.l.b16 %v919
  %v1007 = vunpack.c.h.b16 %v919
  %v1008 = vunpack.c.l.b16 %v920
  %v1009 = vunpack.c.h.b16 %v920
  %v1010 = vunpack.c.l.b16 %v921
  %v1011 = vunpack.c.h.b16 %v921
  %v1012 = vunpack.c.l.b16 %v922
  %v1013 = vunpack.c.h.b16 %v922
  %v1014 = vunpack.c.l.b16 %v923
  %v1015 = vunpack.c.h.b16 %v923
  %v1016 = vunpack.c.l.b16 %v924
  %v1017 = vunpack.c.h.b16 %v924
  %v1018 = vunpack.c.l.b16 %v925
  %v1019 = vunpack.c.h.b16 %v925
  %v1020 = vunpack.c.l.b16 %v926
  %v1021 = vunpack.c.h.b16 %v926
  %v1022 = vunpack.c.l.b16 %v927
  %v1023 = vunpack.c.h.b16 %v927
  %v1024 = vunpack.c.l.b16 %v928
  %v1025 = vunpack.c.h.b16 %v928
  %v1026 = vunpack.c.l.b16 %v929
  %v1027 = vunpack.c.h.b16 %v929
  %v1028 = vunpack.c.l.b16 %v930
  %v1029 = vunpack.c.h.b16 %v930
  %v1030 = vunpack.c.l.b16 %v931
  %v1031 = vunpack.c.h.b16 %v931
  %v1032 = vunpack.c.l.b16 %v932
  %v1033 = vunpack.c.h.b16 %v932
  %v1034 = vunpack.c.l.b16 %v933
  %v1035 = vunpack.c.h.b16 %v933
  %v1036 = vunpack.c.l.b16 %v934
  %v1037 = vunpack.c.h.b16 %v934
  %v1038 = vunpack.c.l.b16 %v935
  %v1039 = vunpack.c.h.b16 %v935
  %v1040 = vunpack.c.l.b16 %v936
  %v1041 = vunpack.c.h.b16 %v936
  %v1042 = vunpack.c.l.b16 %v937
  %v1043 = vunpack.c.h.b16 %v937
  %v1044 = vunpack.c.l.b16 %v938
  %v1045 = vunpack.c.h.b16 %v938
  %v1046 = vunpack.c.l.b16 %v939
  %v1047 = vunpack.c.h.b16 %v939
  %v1048 = vpack.c.b16 %v986, %v984
  %v1049 = vpack.c.b16 %v987, %v985
  %v1050 = vpack.c.b16 %v990, %v988
  %v1051 = vpack.c.b16 %v991, %v989
  %v1052 = vpack.c.b16 %v994, %v992
  %v1053 = vpack.c.b16 %v995, %v993
  %v1054 = vpack.c.b16 %v998, %v996
  %v1055 = vpack.c.b16 %v999, %v997
  %v1056 = vpack.c.b16 %v1002, %v1000
  %v1057 = vpack.c.b16 %v1003, %v1001
  %v1058 = vpack.c.b16 %v1006, %v1004
  %v1059 = vpack.c.b16 %v1007, %v1005
  %v1060 = vpack.c.b16 %v1010, %v1008
  %v1061 = vpack.c.b16 %v1011, %v1009
  %v1062 = vpack.c.b16 %v1014, %v1012
  %v1063 = vpack.c.b16 %v1015, %v1013
  %v1064 = vpack.c.b16 %v1018, %v1016
  %v1065 = vpack.c.b16 %v1019, %v1017
  %v1066 = vpack.c.b16 %v1022, %v1020
  %v1067 = vpack.c.b16 %v1023, %v1021
  %v1068 = vpack.c.b16 %v1026, %v1024
  %v1069 = vpack.c.b16 %v1027, %v1025
  %v1070 = vpack.c.b16 %v1030, %v1028
  %v1071 = vpack.c.b16 %v1031, %v1029
  %v1072 = vpack.c.b16 %v1034, %v1032
  %v1073 = vpack.c.b16 %v1035, %v1033
  %v1074 = vpack.c.b16 %v1038, %v1036
  %v1075 = vpack.c.b16 %v1039, %v1037
  %v1076 = vpack.c.b16 %v1042, %v1040
  %v1077 = vpack.c.b16 %v1043, %v1041
  %v1078 = vpack.c.b16 %v1046, %v1044
  %v1079 = vpack.c.b16 %v1047, %v1045
  %1112 = vmatprep.subr.bf16.mxu0 %v1063
  %1113 = vmatpush1.bf16.msra.mxu0 %v1062
  %1114 = vmatprep.subr.bf16.mxu0 %v1061
  %1115 = vmatpush1.bf16.msra.mxu0 %v1060
  %1116 = vmatprep.subr.bf16.mxu0 %v1059
  %1117 = vmatpush1.bf16.msra.mxu0 %v1058
  %1118 = vmatprep.subr.bf16.mxu0 %v1057
  %1119 = vmatpush1.bf16.msra.mxu0 %v1056
  %1120 = vmatprep.subr.bf16.mxu0 %v1055
  %1121 = vmatpush1.bf16.msra.mxu0 %v1054
  %1122 = vmatprep.subr.bf16.mxu0 %v1053
  %1123 = vmatpush1.bf16.msra.mxu0 %v1052
  %1124 = vmatprep.subr.bf16.mxu0 %v1051
  %1125 = vmatpush1.bf16.msra.mxu0 %v1050
  %1126 = vmatprep.subr.bf16.mxu0 %v1049
  %1127 = vmatpush1.bf16.msra.mxu0 %v1048
  %1128 = vmatprep.subr.bf16.mxu0 %v1079
  %1129 = vmatpush2.bf16.msra.mxu0 %v1078
  %1130 = vmatprep.subr.bf16.mxu0 %v1077
  %1131 = vmatpush2.bf16.msra.mxu0 %v1076
  %1132 = vmatprep.subr.bf16.mxu0 %v1075
  %1133 = vmatpush2.bf16.msra.mxu0 %v1074
  %1134 = vmatprep.subr.bf16.mxu0 %v1073
  %1135 = vmatpush2.bf16.msra.mxu0 %v1072
  %1136 = vmatprep.subr.bf16.mxu0 %v1071
  %1137 = vmatpush2.bf16.msra.mxu0 %v1070
  %1138 = vmatprep.subr.bf16.mxu0 %v1069
  %1139 = vmatpush2.bf16.msra.mxu0 %v1068
  %1140 = vmatprep.subr.bf16.mxu0 %v1067
  %1141 = vmatpush2.bf16.msra.mxu0 %v1066
  %1142 = vmatprep.subr.bf16.mxu0 %v1065
  %1143 = vmatpush2.bf16.msra.mxu0 %v1064
  %1144 = vmatprep.mubr.bf16.mxu0 %v907
  %1145 = vmatmul.mubr.bf16.gmra.mxu0 %v906
  %v1146 = vpop.f32.mrf.mxu0
  %v1147 = vadd.f32 %v945, %v1146
  %v1148 = vpop.f32.mrf.mxu0
  %v1149 = vadd.f32 %v949, %v1148
  %v1150 = vpop.f32.mrf.mxu0
  %v1151 = vpop.f32.mrf.mxu0
  %1152 = vdwg.mxu0
  %v1153 = vmax.f32 %v1147, 0.0
  %v1154 = vmax.f32 %v1149, 0.0
  %v1155 = vpack.c.bf16 %v1153, %v1153
  %v1156 = vpack.c.bf16 %v1154, %v1154
  %v1157 = vld [vmem:[%s5] sm:$0xf]
  %v1158 = vld [vmem:[%s5 + $0x4] sm:$0xf]
  %v1159 = vld [vmem:[%s5 + $0x8] sm:$0xf]
  %v1160 = vld [vmem:[%s5 + $0xc] sm:$0xf]
  %v1161 = vld [vmem:[%s5 + $0x10] sm:$0xf]
  %v1162 = vld [vmem:[%s5 + $0x14] sm:$0xf]
  %v1163 = vld [vmem:[%s5 + $0x18] sm:$0xf]
  %v1164 = vld [vmem:[%s5 + $0x1c] sm:$0xf]
  %v1165 = vld [vmem:[%s5 + $0x20] sm:$0xf]
  %v1166 = vld [vmem:[%s5 + $0x24] sm:$0xf]
  %v1167 = vld [vmem:[%s5 + $0x28] sm:$0xf]
  %v1168 = vld [vmem:[%s5 + $0x2c] sm:$0xf]
  %v1169 = vld [vmem:[%s5 + $0x30] sm:$0xf]
  %v1170 = vld [vmem:[%s5 + $0x34] sm:$0xf]
  %v1171 = vld [vmem:[%s5 + $0x38] sm:$0xf]
  %v1172 = vld [vmem:[%s5 + $0x3c] sm:$0xf]
  %v1173 = vld [vmem:[%s5 + $0x40] sm:$0xf]
  %v1174 = vld [vmem:[%s5 + $0x44] sm:$0xf]
  %v1175 = vld [vmem:[%s5 + $0x48] sm:$0xf]
  %v1176 = vld [vmem:[%s5 + $0x4c] sm:$0xf]
  %v1177 = vld [vmem:[%s5 + $0x50] sm:$0xf]
  %v1178 = vld [vmem:[%s5 + $0x54] sm:$0xf]
  %v1179 = vld [vmem:[%s5 + $0x58] sm:$0xf]
  %v1180 = vld [vmem:[%s5 + $0x5c] sm:$0xf]
  %v1181 = vld [vmem:[%s5 + $0x60] sm:$0xf]
  %v1182 = vld [vmem:[%s5 + $0x64] sm:$0xf]
  %v1183 = vld [vmem:[%s5 + $0x68] sm:$0xf]
  %v1184 = vld [vmem:[%s5 + $0x6c] sm:$0xf]
  %v1185 = vld [vmem:[%s5 + $0x70] sm:$0xf]
  %v1186 = vld [vmem:[%s5 + $0x74] sm:$0xf]
  %v1187 = vld [vmem:[%s5 + $0x78] sm:$0xf]
  %v1188 = vld [vmem:[%s5 + $0x7c] sm:$0xf]
  %v1189 = vld [vmem:[%s6] sm:$0x1]
  %v1191 = vlaneseq
  %v1192 = vshrl.u32 %v1191, 7
  %v1193 = vsub.s32 0, %v1192
  %v1194 = vrot.slane %v1189, %v1193
  %v1228 = vunpack.c.l.b16 %v1157
  %v1229 = vunpack.c.l.b16 %v1158
  %v1230 = vunpack.c.l.b16 %v1159
  %v1231 = vunpack.c.l.b16 %v1160
  %v1232 = vunpack.c.l.b16 %v1161
  %v1233 = vunpack.c.l.b16 %v1162
  %v1234 = vunpack.c.l.b16 %v1163
  %v1235 = vunpack.c.l.b16 %v1164
  %v1236 = vunpack.c.l.b16 %v1165
  %v1237 = vunpack.c.l.b16 %v1166
  %v1238 = vunpack.c.l.b16 %v1167
  %v1239 = vunpack.c.l.b16 %v1168
  %v1240 = vunpack.c.l.b16 %v1169
  %v1241 = vunpack.c.l.b16 %v1170
  %v1242 = vunpack.c.l.b16 %v1171
  %v1243 = vunpack.c.l.b16 %v1172
  %v1244 = vunpack.c.l.b16 %v1173
  %v1245 = vunpack.c.l.b16 %v1174
  %v1246 = vunpack.c.l.b16 %v1175
  %v1247 = vunpack.c.l.b16 %v1176
  %v1248 = vunpack.c.l.b16 %v1177
  %v1249 = vunpack.c.l.b16 %v1178
  %v1250 = vunpack.c.l.b16 %v1179
  %v1251 = vunpack.c.l.b16 %v1180
  %v1252 = vunpack.c.l.b16 %v1181
  %v1253 = vunpack.c.l.b16 %v1182
  %v1254 = vunpack.c.l.b16 %v1183
  %v1255 = vunpack.c.l.b16 %v1184
  %v1256 = vunpack.c.l.b16 %v1185
  %v1257 = vunpack.c.l.b16 %v1186
  %v1258 = vunpack.c.l.b16 %v1187
  %v1259 = vunpack.c.l.b16 %v1188
  %v1260 = vpack.c.b16 %v1229, %v1228
  %v1261 = vpack.c.b16 %v1231, %v1230
  %v1262 = vpack.c.b16 %v1233, %v1232
  %v1263 = vpack.c.b16 %v1235, %v1234
  %v1264 = vpack.c.b16 %v1237, %v1236
  %v1265 = vpack.c.b16 %v1239, %v1238
  %v1266 = vpack.c.b16 %v1241, %v1240
  %v1267 = vpack.c.b16 %v1243, %v1242
  %v1268 = vpack.c.b16 %v1245, %v1244
  %v1269 = vpack.c.b16 %v1247, %v1246
  %v1270 = vpack.c.b16 %v1249, %v1248
  %v1271 = vpack.c.b16 %v1251, %v1250
  %v1272 = vpack.c.b16 %v1253, %v1252
  %v1273 = vpack.c.b16 %v1255, %v1254
  %v1274 = vpack.c.b16 %v1257, %v1256
  %v1275 = vpack.c.b16 %v1259, %v1258
  %1292 = vmatprep.subr.bf16.mxu0 0
  %1293 = vmatpush1.bf16.msra.mxu0 %v1267
  %1294 = vmatprep.subr.bf16.mxu0 0
  %1295 = vmatpush1.bf16.msra.mxu0 %v1266
  %1296 = vmatprep.subr.bf16.mxu0 0
  %1297 = vmatpush1.bf16.msra.mxu0 %v1265
  %1298 = vmatprep.subr.bf16.mxu0 0
  %1299 = vmatpush1.bf16.msra.mxu0 %v1264
  %1300 = vmatprep.subr.bf16.mxu0 0
  %1301 = vmatpush1.bf16.msra.mxu0 %v1263
  %1302 = vmatprep.subr.bf16.mxu0 0
  %1303 = vmatpush1.bf16.msra.mxu0 %v1262
  %1304 = vmatprep.subr.bf16.mxu0 0
  %1305 = vmatpush1.bf16.msra.mxu0 %v1261
  %1306 = vmatprep.subr.bf16.mxu0 0
  %1307 = vmatpush1.bf16.msra.mxu0 %v1260
  %1308 = vmatprep.subr.bf16.mxu0 0
  %1309 = vmatpush2.bf16.msra.mxu0 %v1275
  %1310 = vmatprep.subr.bf16.mxu0 0
  %1311 = vmatpush2.bf16.msra.mxu0 %v1274
  %1312 = vmatprep.subr.bf16.mxu0 0
  %1313 = vmatpush2.bf16.msra.mxu0 %v1273
  %1314 = vmatprep.subr.bf16.mxu0 0
  %1315 = vmatpush2.bf16.msra.mxu0 %v1272
  %1316 = vmatprep.subr.bf16.mxu0 0
  %1317 = vmatpush2.bf16.msra.mxu0 %v1271
  %1318 = vmatprep.subr.bf16.mxu0 0
  %1319 = vmatpush2.bf16.msra.mxu0 %v1270
  %1320 = vmatprep.subr.bf16.mxu0 0
  %1321 = vmatpush2.bf16.msra.mxu0 %v1269
  %1322 = vmatprep.subr.bf16.mxu0 0
  %1323 = vmatpush2.bf16.msra.mxu0 %v1268
  %1324 = vmatprep.mubr.bf16.mxu0 %v1156
  %1325 = vmatmul.mubr.bf16.gmra.mxu0 %v1155
  %v1326 = vpop.f32.mrf.mxu0
  %v1327 = vadd.f32 %v1194, %v1326
  %v1328 = vpop.f32.mrf.mxu0
  %v1329 = vpop.f32.mrf.mxu0
  %v1330 = vpop.f32.mrf.mxu0
  %1331 = vdwg.mxu0
  %1332 = vst [vmem:[%s7] sm:$0xff] %v1327
  // Predicated region
  $region30: #{mlp_forward.1} parent=0 // pred_check
    _
  $region31: #{mlp_forward.1} parent=0 // pred_check_branch
    %1334 = sbr.rel (0) target = $region33
  $region32: #{mlp_forward.1} parent=0 // pred_region
    _
  $region33: #{mlp_forward.1} parent=0 // pred_fallthru
    _
  // Predicated region
  $region34: #{mlp_forward.1} parent=0 // pred_check
    _
  $region35: #{mlp_forward.1} parent=0 // pred_check_branch
    %1336 = sbr.rel (0) target = $region37
  $region36: #{mlp_forward.1} parent=0 // pred_region
    _
  $region37: #{mlp_forward.1} parent=0 // pred_fallthru
    _

</llo_original>
